<compile_context>
chip_gen: v6e
topology: v6e:2x2x1
jax: 0.10.0
libtpu: 0.0.40
codegen_flags: <defaults>
</compile_context>

<pallas_src>
import jax
import jax.numpy as jnp
from jax.experimental import pallas as pl
from jax.experimental.pallas import tpu as pltpu

_LANES = 128


def _identity_kernel(x_ref, o_ref):
    # Whole-tile load + store (element-wise identity).
    o_ref[...] = x_ref[...]


def _choose_row_tile(rows: int, itemsize: int) -> int:
    """Pick a lane-dense row tile: whole array if small, else ~2 MiB blocks."""
    full_bytes = rows * _LANES * itemsize
    if full_bytes <= (4 << 20):
        return rows  # one grid step; block == full array (always layout-legal)
    # ~2 MiB per block, rows multiple of 8, must divide total rows evenly.
    target = max(8, ((2 << 20) // (_LANES * itemsize)) // 8 * 8)
    t = target
    while t >= 8:
        if rows % t == 0:
            return t
        t -= 8
    return rows  # no even multiple-of-8 divisor: fall back to whole array


def _identity_copy_2d(x2: jax.Array) -> jax.Array:
    rows, lanes = x2.shape
    tile_rows = _choose_row_tile(rows, x2.dtype.itemsize)
    grid = (rows // tile_rows,)
    return pl.pallas_call(
        _identity_kernel,
        out_shape=jax.ShapeDtypeStruct((rows, lanes), x2.dtype),
        grid=grid,
        in_specs=[pl.BlockSpec((tile_rows, lanes), lambda i: (i, 0))],
        out_specs=pl.BlockSpec((tile_rows, lanes), lambda i: (i, 0)),
        input_output_aliases={0: 0},
        compiler_params=pltpu.CompilerParams(
            dimension_semantics=("parallel",)
        ),
    )(x2)


def _identity_copy_full(x: jax.Array) -> jax.Array:
    # Fallback when total elements are not a multiple of 128: one whole-array
    # block (block dims equal full array dims, so tiling rules are satisfied).
    return pl.pallas_call(
        _identity_kernel,
        out_shape=jax.ShapeDtypeStruct(x.shape, x.dtype),
        input_output_aliases={0: 0},
    )(x)


@jax.jit
def agent_forward(x: jax.Array) -> jax.Array:
    """Pallas implementation of Agent.forward (identity)."""
    n = x.size
    if n % _LANES == 0:
        x2 = x.reshape(n // _LANES, _LANES)  # lane-dense 2D slab
        return _identity_copy_2d(x2).reshape(x.shape)
    return _identity_copy_full(x)


if __name__ == "__main__":
    key = jax.random.PRNGKey(0)
    # Small NCHW input consistent with a conv-style module interface.
    x = jax.random.normal(key, (2, 4, 16, 16), dtype=jnp.float32)

    y = agent_forward(x)
    y = jax.block_until_ready(y)

    # Verify identity semantics exactly.
    assert y.shape == x.shape and y.dtype == x.dtype
    assert bool(jnp.array_equal(y, x))

    # TODO(synk): Agent.__call__ (game policy returning action=0), save/load/
    # train/test are I/O / environment logic with no Pallas equivalent; only
    # forward() is a tensor op and is implemented above.
    print("KERNEL_OK")
</pallas_src>

<mosaic_0001>
module attributes {stable_mosaic.version = 11 : i64} {
  func.func @_identity_kernel(%arg0: i32, %arg1: memref<16x128xf32, #tpu.memory_space<vmem>>, %arg2: memref<16x128xf32, #tpu.memory_space<vmem>>) attributes {dimension_semantics = [#tpu.dimension_semantics<parallel>], iteration_bounds = array<i64: 1>, scalar_prefetch = 0 : i64, scratch_operands = 0 : i64, tpu.core_type = #tpu.core_type<tc>, window_params = [{transform_indices = @transform_0, window_bounds = array<i64: 16, 128>}, {transform_indices = @transform_1, window_bounds = array<i64: 16, 128>}]} {
    %c0 = arith.constant 0 : index
    %c0_0 = arith.constant 0 : index
    %0 = vector.load %arg1[%c0, %c0_0] : memref<16x128xf32, #tpu.memory_space<vmem>>, vector<16x128xf32>
    %c0_1 = arith.constant 0 : index
    %c0_2 = arith.constant 0 : index
    %1 = vector.load %arg2[%c0_1, %c0_2] : memref<16x128xf32, #tpu.memory_space<vmem>>, vector<16x128xf32>
    tpu.vector_store %arg2[%c0_1, %c0_2], %0 {strides = array<i32>} : memref<16x128xf32, #tpu.memory_space<vmem>>, vector<16x128xf32>,
    return
  }
  func.func @transform_0(%arg0: i32) -> (i32, i32) {
    %c0_i32 = arith.constant 0 : i32
    %c0_i32_0 = arith.constant 0 : i32
    return %arg0, %c0_i32 : i32, i32
  }
  func.func @transform_1(%arg0: i32) -> (i32, i32) {
    %c0_i32 = arith.constant 0 : i32
    %c0_i32_0 = arith.constant 0 : i32
    return %arg0, %c0_i32 : i32, i32
  }
}

</mosaic_0001>

<llo_original>
// kernel: agent_forward.1
$region0: #{agent_forward.1}
  #allocation0 [shape = 'u32[]', space=smem, size = 0x4, offset = 0x4, fixed_abs, tag = 'smem constant byte address 0x4 - core index']
  #allocation1 [shape = 'u32[144,128]{1,0:T(1,128)}', space=vmem, size = 0x12000, scoped, tag = 'internal scratch']
  %s0 = inlined_call_operand.vmem [shape: f32[16,128], index: 0, kind: input, shape index: {}, may-alias: {0,1}]
  %s1 = inlined_call_operand.vmem [shape: f32[16,128], index: 1, kind: output, shape index: {}, may-alias: {0,1}]
  %s2 = sld [smem:[#allocation0]]
  $region14: #{agent_forward.1} parent=0
    _
  %s4 = ssub.s32 1, %s2
  %s5 = scalar_select 0, %s4, %s2
  // Predicated region
  $region2: #{agent_forward.1} parent=0 // pred_check
    _
  $region3: #{agent_forward.1} parent=0 // pred_check_branch
    %7 = sbr.rel (0) target = $region5
  $region4: #{agent_forward.1} parent=0 // pred_region
    _
  $region5: #{agent_forward.1} parent=0 // pred_fallthru
    _
  %v8 = vld [vmem:[%s0] sm:$0xff]
  %v9 = vld [vmem:[%s0 + $0x8] sm:$0xff]
  %10 = vst [vmem:[%s1] sm:$0xff] %v8
  %11 = vst [vmem:[%s1 + $0x8] sm:$0xff] %v9
  // Predicated region
  $region6: #{agent_forward.1} parent=0 // pred_check
    _
  $region7: #{agent_forward.1} parent=0 // pred_check_branch
    %13 = sbr.rel (0) target = $region9
  $region8: #{agent_forward.1} parent=0 // pred_region
    _
  $region9: #{agent_forward.1} parent=0 // pred_fallthru
    _
  // Predicated region
  $region10: #{agent_forward.1} parent=0 // pred_check
    _
  $region11: #{agent_forward.1} parent=0 // pred_check_branch
    %15 = sbr.rel (0) target = $region13
  $region12: #{agent_forward.1} parent=0 // pred_region
    _
  $region13: #{agent_forward.1} parent=0 // pred_fallthru
    _

</llo_original>
